<compile_context>
chip_gen: v5e
topology: v5e:2x2
jax: 0.10.0
libtpu: 0.0.40
codegen_flags: <defaults>
</compile_context>

<pallas_src>
import functools

import numpy as np
import jax
import jax.numpy as jnp
from jax import lax
from jax.experimental import pallas as pl
from jax.experimental.pallas import tpu as pltpu

# Lane-dense layouts tried in order (all powers of two, multiples of 128).
_COL_CHOICES = (1024, 512, 256, 128)
_TRAIN_TILE_ROWS = 1024          # 1024 x 1024 f32 = 4 MiB per block
_EVAL_TILE_ROWS = 512            # 512 x 1024 f32 = 2 MiB per block (+ 3 scratch bufs)
_VMEM_LIMIT_BYTES = 32 * 1024 * 1024

# Hash constants as numpy scalars -> lowered as jaxpr literals, never captured
# as jax-array consts (the bug in the previous version).
_GOLDEN = np.uint32(0x9E3779B9)
_MIX_M1 = np.uint32(0x7FEB352D)
_MIX_M2 = np.uint32(0x846CA68B)


def _mix32(x):
    """lowbias32 integer mixer (uint32 xor/shift/mul), portable VPU ops."""
    x = x ^ (x >> 16)
    x = x * _MIX_M1
    x = x ^ (x >> 15)
    x = x * _MIX_M2
    x = x ^ (x >> 16)
    return x


def _keep_threshold(p):
    """Keep an element iff bits >= thresh  =>  P[keep] = 1 - p (integer compare)."""
    t = int(round(float(p) * 2.0 ** 32))
    return np.uint32(min(max(t, 0), 2 ** 32 - 1))


def _global_index(shape):
    """uint32 global element index for every element of the current block.

    Built as scalar_base + (row_iota << log2(cols)) + col_iota: one scalar
    multiply on program_id, zero per-element integer multiplies.
    """
    block_elems = shape[0] * shape[1]
    shift = shape[1].bit_length() - 1            # cols is always a power of two
    r = lax.broadcasted_iota(jnp.int32, shape, 0).astype(jnp.uint32)
    c = lax.broadcasted_iota(jnp.int32, shape, 1).astype(jnp.uint32)
    base = pl.program_id(0).astype(jnp.uint32) * block_elems
    # TODO(synk): gidx wraps for tensors with > 2^32 elements (reused streams).
    return base + (r << shift) + c


def _dropout_train_kernel(seed_ref, x_ref, o_ref, *, p):
    """Training branch: standard inverted dropout."""
    state = _mix32(_global_index(x_ref.shape)
                   + seed_ref[0].astype(jnp.uint32) * _GOLDEN)
    thresh = _keep_threshold(p)
    scale = 1.0 / (1.0 - p)
    x = x_ref[...].astype(jnp.float32)
    o_ref[...] = jnp.where(state >= thresh, x * scale, 0.0).astype(o_ref.dtype)


def _dropout_dpp_eval_kernel(seed_ref, x_ref, o_ref, state_ref, sm_ref, hit_ref,
                             *, p, max_n, max_frac, n_total, has_tail):
    """Eval+activate branch: accumulate masks until enough neurons are nonzero."""
    shape = x_ref.shape
    thresh = _keep_threshold(p)

    gidx = _global_index(shape)
    seed_mix = seed_ref[0].astype(jnp.uint32) * _GOLDEN
    # Per-element xorshift32 stream, seeded by a lowbias32 hash of the global
    # element index (| 1 guarantees a nonzero xorshift state).
    state_ref[...] = _mix32(gidx + seed_mix) | np.uint32(1)

    if has_tail:
        # Padded / out-of-bounds tail elements must not bias the stopping test.
        valid = (gidx < np.uint32(n_total)).astype(jnp.float32)
        total = jnp.sum(valid)
    else:
        valid = None
        total = float(shape[0] * shape[1])
    target = max_frac * total

    def draw_mask():
        # TODO(synk): reference uses a DPP-correlated mask (build_mask('dpp'),
        # not provided in the source); independent Bernoulli(1-p) is the stand-in.
        s = state_ref[...]
        s = s ^ (s << 13)
        s = s ^ (s >> 17)
        s = s ^ (s << 5)
        state_ref[...] = s
        return (s >= thresh).astype(jnp.float32)

    def count_nonzero():
        h = hit_ref[...]
        if has_tail:
            h = h * valid
        return jnp.sum(h)

    # First get_mask(), i = 1 (matches the reference's pre-loop draw).
    m0 = draw_mask()
    sm_ref[...] = m0
    hit_ref[...] = m0
    nz0 = count_nonzero()

    # TODO(synk): the stopping fraction and divisor i are per-block here; the
    # PyTorch reference computes a single global scalar via .item().
    def cond(carry):
        i, nz = carry
        return jnp.logical_and(i < max_n, nz < target)

    def body(carry):
        i, _ = carry
        m = draw_mask()
        sm_ref[...] = sm_ref[...] + m
        hit_ref[...] = jnp.maximum(hit_ref[...], m)
        return i + 1, count_nonzero()

    i_final, _ = lax.while_loop(cond, body, (np.int32(1), nz0))

    inv = 1.0 / i_final.astype(jnp.float32)            # single scalar divide
    o_ref[...] = (x_ref[...].astype(jnp.float32) * sm_ref[...] * inv).astype(o_ref.dtype)


def _plan_layout(n, max_tile_rows):
    """Pick a lane-dense (rows, cols) slab and a row tile.

    cols is chosen to divide n whenever n is a multiple of 128, so the reshape
    is metadata-only (no pad/slice copies around the pallas_call).
    """
    cols = next((c for c in _COL_CHOICES if n % c == 0), None)
    if cols is None:
        # TODO(synk): sizes not divisible by 128 still pay one pad + slice copy.
        cols = _COL_CHOICES[0]
    rows = pl.cdiv(n, cols)
    pad = rows * cols - n
    if rows <= max_tile_rows:
        if rows >= 16 and rows % 16 == 0:
            tile_rows = rows // 2        # >= 2 blocks: both v7x TensorCores busy
        else:
            tile_rows = rows             # single full-extent block
    else:
        tile_rows = max_tile_rows        # ragged last block is masked by Pallas
    return rows, cols, tile_rows, pad


def _launch(kernel, x, seed, *, rows, cols, tile_rows, pad, scratch_shapes=()):
    orig_shape = x.shape
    n = x.size
    flat = x.reshape(-1)
    if pad:
        flat = jnp.pad(flat, (0, pad))
    x2d = flat.reshape(rows, cols)                    # native dtype end-to-end
    seed_arr = jnp.full((1,), seed, dtype=jnp.int32)

    out2d = pl.pallas_call(
        kernel,
        out_shape=jax.ShapeDtypeStruct((rows, cols), x.dtype),
        grid_spec=pltpu.PrefetchScalarGridSpec(
            num_scalar_prefetch=1,                    # seed lands in SMEM
            grid=(pl.cdiv(rows, tile_rows),),
            in_specs=[pl.BlockSpec((tile_rows, cols), lambda i, s: (i, 0))],
            out_specs=pl.BlockSpec((tile_rows, cols), lambda i, s: (i, 0)),
            scratch_shapes=list(scratch_shapes),
        ),
        compiler_params=pltpu.CompilerParams(
            dimension_semantics=("parallel",),        # shards blocks across v7x TCs
            vmem_limit_bytes=_VMEM_LIMIT_BYTES,
        ),
    )(seed_arr, x2d)

    out = out2d.reshape(-1)
    if pad:
        out = out[:n]
    return out.reshape(orig_shape)


@functools.partial(jax.jit, static_argnames=("p",))
def _dropout_train(x, seed, *, p):
    rows, cols, tile_rows, pad = _plan_layout(x.size, _TRAIN_TILE_ROWS)
    kernel = functools.partial(_dropout_train_kernel, p=p)
    return _launch(kernel, x, seed, rows=rows, cols=cols, tile_rows=tile_rows, pad=pad)


@functools.partial(jax.jit, static_argnames=("p", "max_n", "max_frac"))
def _dropout_dpp_eval(x, seed, *, p, max_n, max_frac):
    rows, cols, tile_rows, pad = _plan_layout(x.size, _EVAL_TILE_ROWS)
    has_tail = bool(pad) or (rows % tile_rows != 0)
    kernel = functools.partial(
        _dropout_dpp_eval_kernel, p=p, max_n=max_n, max_frac=max_frac,
        n_total=x.size, has_tail=has_tail)
    scratch = (
        pltpu.VMEM((tile_rows, cols), jnp.uint32),    # per-element RNG state
        pltpu.VMEM((tile_rows, cols), jnp.float32),   # sum_mask accumulator
        pltpu.VMEM((tile_rows, cols), jnp.float32),   # "already nonzero" tracker
    )
    return _launch(kernel, x, seed, rows=rows, cols=cols, tile_rows=tile_rows,
                   pad=pad, scratch_shapes=scratch)


class DropoutDPP:
    """JAX/Pallas port of DropoutDPP (forward-pass semantics only)."""

    dropout_id = -1

    def __init__(self, p, activate=False, mask_name="dpp", max_n=100, max_frac=0.4, coef=1.0):
        self.p = float(p)
        self.p_init = float(p)
        self.activate = activate
        self.max_n = int(max_n)
        self.max_frac = float(max_frac)
        self.coef = coef               # unused in forward, kept for parity
        DropoutDPP.dropout_id += 1
        self.curr_dropout_id = DropoutDPP.dropout_id
        self.training = False

    def __call__(self, x, seed=0):
        if x.size == 0:
            return x
        if self.training:
            if self.p <= 0.0:
                return x
            if self.p >= 1.0:
                return jnp.zeros_like(x)
            return _dropout_train(x, seed, p=self.p)
        if not self.activate:
            return x
        return _dropout_dpp_eval(x, seed, p=self.p, max_n=self.max_n,
                                 max_frac=self.max_frac)


if __name__ == "__main__":
    key = jax.random.PRNGKey(0)
    x = jax.random.normal(key, (2, 4, 16, 16), dtype=jnp.float32)  # NCHW

    drop = DropoutDPP(p=0.9, activate=True, max_n=100, max_frac=0.4)

    # Eval + activate: the DPP accumulated-mask branch (hot path).
    drop.training = False
    y_eval = drop(x, seed=123)
    jax.block_until_ready(y_eval)
    assert y_eval.shape == x.shape and y_eval.dtype == x.dtype
    assert bool(jnp.all(jnp.isfinite(y_eval)))

    # Eval + !activate: identity.
    drop.activate = False
    y_id = drop(x, seed=0)
    jax.block_until_ready(y_id)
    assert bool(jnp.all(y_id == x))
    drop.activate = True

    # Training branch: standard inverted dropout.
    drop.training = True
    y_train = drop(x, seed=7)
    jax.block_until_ready(y_train)
    assert y_train.shape == x.shape and y_train.dtype == x.dtype

    print("KERNEL_OK")
</pallas_src>

<mosaic_0001>
module attributes {stable_mosaic.version = 11 : i64} {
  func.func @_dropout_dpp_eval_kernel(%arg0: i32, %arg1: memref<1xi32, #tpu.memory_space<smem>>, %arg2: memref<2x1024xf32, #tpu.memory_space<vmem>>, %arg3: memref<2x1024xf32, #tpu.memory_space<vmem>>, %arg4: memref<2x1024xi32, #tpu.memory_space<vmem>>, %arg5: memref<2x1024xf32, #tpu.memory_space<vmem>>, %arg6: memref<2x1024xf32, #tpu.memory_space<vmem>>) attributes {dimension_semantics = [#tpu.dimension_semantics<parallel>], iteration_bounds = array<i64: 1>, scalar_prefetch = 1 : i64, scratch_operands = 3 : i64, tpu.core_type = #tpu.core_type<tc>, window_params = [{transform_indices = @transform_0, window_bounds = array<i64: 2, 1024>}, {transform_indices = @transform_1, window_bounds = array<i64: 2, 1024>}]} {
    %0 = tpu.iota {dimensions = array<i32: 0>} : vector<2x1024xi32>
    %1 = tpu.iota {dimensions = array<i32: 1>} : vector<2x1024xi32>
    %c2048_i32 = arith.constant 2048 : i32
    %2 = arith.muli %arg0, %c2048_i32 : i32
    %c10_i32 = arith.constant 10 : i32
    %3 = vector.broadcast %c10_i32 : i32 to vector<2x1024xi32>
    %4 = arith.shli %0, %3 : vector<2x1024xi32>
    %5 = vector.broadcast %2 : i32 to vector<2x1024xi32>
    %6 = arith.addi %5, %4 : vector<2x1024xi32>
    %7 = arith.addi %6, %1 : vector<2x1024xi32>
    %c0 = arith.constant 0 : index
    %8 = memref.load %arg1[%c0] : memref<1xi32, #tpu.memory_space<smem>>
    %c-1640531527_i32 = arith.constant -1640531527 : i32
    %9 = arith.muli %8, %c-1640531527_i32 : i32
    %10 = vector.broadcast %9 : i32 to vector<2x1024xi32>
    %11 = arith.addi %7, %10 : vector<2x1024xi32>
    %c16_i32 = arith.constant 16 : i32
    %12 = vector.broadcast %c16_i32 : i32 to vector<2x1024xi32>
    %13 = arith.shrui %11, %12 : vector<2x1024xi32>
    %14 = arith.xori %11, %13 : vector<2x1024xi32>
    %c2146121005_i32 = arith.constant 2146121005 : i32
    %15 = vector.broadcast %c2146121005_i32 : i32 to vector<2x1024xi32>
    %16 = arith.muli %14, %15 : vector<2x1024xi32>
    %c15_i32 = arith.constant 15 : i32
    %17 = vector.broadcast %c15_i32 : i32 to vector<2x1024xi32>
    %18 = arith.shrui %16, %17 : vector<2x1024xi32>
    %19 = arith.xori %16, %18 : vector<2x1024xi32>
    %c-2073254261_i32 = arith.constant -2073254261 : i32
    %20 = vector.broadcast %c-2073254261_i32 : i32 to vector<2x1024xi32>
    %21 = arith.muli %19, %20 : vector<2x1024xi32>
    %c16_i32_0 = arith.constant 16 : i32
    %22 = vector.broadcast %c16_i32_0 : i32 to vector<2x1024xi32>
    %23 = arith.shrui %21, %22 : vector<2x1024xi32>
    %24 = arith.xori %21, %23 : vector<2x1024xi32>
    %c1_i32 = arith.constant 1 : i32
    %25 = vector.broadcast %c1_i32 : i32 to vector<2x1024xi32>
    %26 = arith.ori %24, %25 : vector<2x1024xi32>
    %c0_1 = arith.constant 0 : index
    %c0_2 = arith.constant 0 : index
    %27 = vector.load %arg4[%c0_1, %c0_2] : memref<2x1024xi32, #tpu.memory_space<vmem>>, vector<2x1024xi32>
    tpu.vector_store %arg4[%c0_1, %c0_2], %26 {strides = array<i32>} : memref<2x1024xi32, #tpu.memory_space<vmem>>, vector<2x1024xi32>,
    %c0_3 = arith.constant 0 : index
    %c0_4 = arith.constant 0 : index
    %28 = vector.load %arg4[%c0_3, %c0_4] : memref<2x1024xi32, #tpu.memory_space<vmem>>, vector<2x1024xi32>
    %c13_i32 = arith.constant 13 : i32
    %29 = vector.broadcast %c13_i32 : i32 to vector<2x1024xi32>
    %30 = arith.shli %28, %29 : vector<2x1024xi32>
    %31 = arith.xori %28, %30 : vector<2x1024xi32>
    %c17_i32 = arith.constant 17 : i32
    %32 = vector.broadcast %c17_i32 : i32 to vector<2x1024xi32>
    %33 = arith.shrui %31, %32 : vector<2x1024xi32>
    %34 = arith.xori %31, %33 : vector<2x1024xi32>
    %c5_i32 = arith.constant 5 : i32
    %35 = vector.broadcast %c5_i32 : i32 to vector<2x1024xi32>
    %36 = arith.shli %34, %35 : vector<2x1024xi32>
    %37 = arith.xori %34, %36 : vector<2x1024xi32>
    %c0_5 = arith.constant 0 : index
    %c0_6 = arith.constant 0 : index
    %38 = vector.load %arg4[%c0_5, %c0_6] : memref<2x1024xi32, #tpu.memory_space<vmem>>, vector<2x1024xi32>
    tpu.vector_store %arg4[%c0_5, %c0_6], %37 {strides = array<i32>} : memref<2x1024xi32, #tpu.memory_space<vmem>>, vector<2x1024xi32>,
    %c-429496730_i32 = arith.constant -429496730 : i32
    %39 = vector.broadcast %c-429496730_i32 : i32 to vector<2x1024xi32>
    %40 = arith.cmpi uge, %37, %39 : vector<2x1024xi32>
    %41 = arith.extui %40 : vector<2x1024xi1> to vector<2x1024xi32>
    %42 = arith.sitofp %41 : vector<2x1024xi32> to vector<2x1024xf32>
    %c0_7 = arith.constant 0 : index
    %c0_8 = arith.constant 0 : index
    %43 = vector.load %arg5[%c0_7, %c0_8] : memref<2x1024xf32, #tpu.memory_space<vmem>>, vector<2x1024xf32>
    tpu.vector_store %arg5[%c0_7, %c0_8], %42 {strides = array<i32>} : memref<2x1024xf32, #tpu.memory_space<vmem>>, vector<2x1024xf32>,
    %c0_9 = arith.constant 0 : index
    %c0_10 = arith.constant 0 : index
    %44 = vector.load %arg6[%c0_9, %c0_10] : memref<2x1024xf32, #tpu.memory_space<vmem>>, vector<2x1024xf32>
    tpu.vector_store %arg6[%c0_9, %c0_10], %42 {strides = array<i32>} : memref<2x1024xf32, #tpu.memory_space<vmem>>, vector<2x1024xf32>,
    %c0_11 = arith.constant 0 : index
    %c0_12 = arith.constant 0 : index
    %45 = vector.load %arg6[%c0_11, %c0_12] : memref<2x1024xf32, #tpu.memory_space<vmem>>, vector<2x1024xf32>
    %46 = vector.shape_cast %45 : vector<2x1024xf32> to vector<1x2x1024xf32>
    %cst = arith.constant dense<0.000000e+00> : vector<1xf32>
    %47 = vector.multi_reduction <add>, %46, %cst [1, 2] : vector<1x2x1024xf32> to vector<1xf32>
    %48 = vector.shape_cast %47 : vector<1xf32> to vector<1x1x1xf32>
    %49 = vector.extract %48[0, 0, 0] : f32 from vector<1x1x1xf32>
    %c1_i32_13 = arith.constant 1 : i32
    %50:2 = scf.while (%arg7 = %c1_i32_13, %arg8 = %49) : (i32, f32) -> (i32, f32) {
      %c100_i32 = arith.constant 100 : i32
      %59 = arith.cmpi slt, %arg7, %c100_i32 : i32
      %cst_21 = arith.constant 8.192000e+02 : f32
      %60 = arith.cmpf olt, %arg8, %cst_21 : f32
      %61 = arith.andi %59, %60 : i1
      scf.condition(%61) %arg7, %arg8 : i32, f32
    } do {
    ^bb0(%arg7: i32, %arg8: f32):
      %c0_21 = arith.constant 0 : index
      %c0_22 = arith.constant 0 : index
      %59 = vector.load %arg4[%c0_21, %c0_22] : memref<2x1024xi32, #tpu.memory_space<vmem>>, vector<2x1024xi32>
      %c13_i32_23 = arith.constant 13 : i32
      %60 = vector.broadcast %c13_i32_23 : i32 to vector<2x1024xi32>
      %61 = arith.shli %59, %60 : vector<2x1024xi32>
      %62 = arith.xori %59, %61 : vector<2x1024xi32>
      %c17_i32_24 = arith.constant 17 : i32
      %63 = vector.broadcast %c17_i32_24 : i32 to vector<2x1024xi32>
      %64 = arith.shrui %62, %63 : vector<2x1024xi32>
      %65 = arith.xori %62, %64 : vector<2x1024xi32>
      %c5_i32_25 = arith.constant 5 : i32
      %66 = vector.broadcast %c5_i32_25 : i32 to vector<2x1024xi32>
      %67 = arith.shli %65, %66 : vector<2x1024xi32>
      %68 = arith.xori %65, %67 : vector<2x1024xi32>
      %c0_26 = arith.constant 0 : index
      %c0_27 = arith.constant 0 : index
      %69 = vector.load %arg4[%c0_26, %c0_27] : memref<2x1024xi32, #tpu.memory_space<vmem>>, vector<2x1024xi32>
      tpu.vector_store %arg4[%c0_26, %c0_27], %68 {strides = array<i32>} : memref<2x1024xi32, #tpu.memory_space<vmem>>, vector<2x1024xi32>,
      %c-429496730_i32_28 = arith.constant -429496730 : i32
      %70 = vector.broadcast %c-429496730_i32_28 : i32 to vector<2x1024xi32>
      %71 = arith.cmpi uge, %68, %70 : vector<2x1024xi32>
      %72 = arith.extui %71 : vector<2x1024xi1> to vector<2x1024xi32>
      %73 = arith.sitofp %72 : vector<2x1024xi32> to vector<2x1024xf32>
      %c0_29 = arith.constant 0 : index
      %c0_30 = arith.constant 0 : index
      %74 = vector.load %arg5[%c0_29, %c0_30] : memref<2x1024xf32, #tpu.memory_space<vmem>>, vector<2x1024xf32>
      %75 = arith.addf %74, %73 : vector<2x1024xf32>
      %c0_31 = arith.constant 0 : index
      %c0_32 = arith.constant 0 : index
      %76 = vector.load %arg5[%c0_31, %c0_32] : memref<2x1024xf32, #tpu.memory_space<vmem>>, vector<2x1024xf32>
      tpu.vector_store %arg5[%c0_31, %c0_32], %75 {strides = array<i32>} : memref<2x1024xf32, #tpu.memory_space<vmem>>, vector<2x1024xf32>,
      %c0_33 = arith.constant 0 : index
      %c0_34 = arith.constant 0 : index
      %77 = vector.load %arg6[%c0_33, %c0_34] : memref<2x1024xf32, #tpu.memory_space<vmem>>, vector<2x1024xf32>
      %78 = arith.maximumf %77, %73 : vector<2x1024xf32>
      %c0_35 = arith.constant 0 : index
      %c0_36 = arith.constant 0 : index
      %79 = vector.load %arg6[%c0_35, %c0_36] : memref<2x1024xf32, #tpu.memory_space<vmem>>, vector<2x1024xf32>
      tpu.vector_store %arg6[%c0_35, %c0_36], %78 {strides = array<i32>} : memref<2x1024xf32, #tpu.memory_space<vmem>>, vector<2x1024xf32>,
      %c1_i32_37 = arith.constant 1 : i32
      %80 = arith.addi %arg7, %c1_i32_37 : i32
      %c0_38 = arith.constant 0 : index
      %c0_39 = arith.constant 0 : index
      %81 = vector.load %arg6[%c0_38, %c0_39] : memref<2x1024xf32, #tpu.memory_space<vmem>>, vector<2x1024xf32>
      %82 = vector.shape_cast %81 : vector<2x1024xf32> to vector<1x2x1024xf32>
      %cst_40 = arith.constant dense<0.000000e+00> : vector<1xf32>
      %83 = vector.multi_reduction <add>, %82, %cst_40 [1, 2] : vector<1x2x1024xf32> to vector<1xf32>
      %84 = vector.shape_cast %83 : vector<1xf32> to vector<1x1x1xf32>
      %85 = vector.extract %84[0, 0, 0] : f32 from vector<1x1x1xf32>
      scf.yield %80, %85 : i32, f32
    }
    %51 = arith.sitofp %50#0 : i32 to f32
    %cst_14 = arith.constant 1.000000e+00 : f32
    %52 = arith.divf %cst_14, %51 : f32
    %c0_15 = arith.constant 0 : index
    %c0_16 = arith.constant 0 : index
    %53 = vector.load %arg2[%c0_15, %c0_16] : memref<2x1024xf32, #tpu.memory_space<vmem>>, vector<2x1024xf32>
    %c0_17 = arith.constant 0 : index
    %c0_18 = arith.constant 0 : index
    %54 = vector.load %arg5[%c0_17, %c0_18] : memref<2x1024xf32, #tpu.memory_space<vmem>>, vector<2x1024xf32>
    %55 = arith.mulf %53, %54 : vector<2x1024xf32>
    %56 = vector.broadcast %52 : f32 to vector<2x1024xf32>
    %57 = arith.mulf %55, %56 : vector<2x1024xf32>
    %c0_19 = arith.constant 0 : index
    %c0_20 = arith.constant 0 : index
    %58 = vector.load %arg3[%c0_19, %c0_20] : memref<2x1024xf32, #tpu.memory_space<vmem>>, vector<2x1024xf32>
    tpu.vector_store %arg3[%c0_19, %c0_20], %57 {strides = array<i32>} : memref<2x1024xf32, #tpu.memory_space<vmem>>, vector<2x1024xf32>,
    return
  }
  func.func @transform_0(%arg0: i32, %arg1: memref<1xi32, #tpu.memory_space<smem>>) -> (i32, i32) {
    %c0_i32 = arith.constant 0 : i32
    %c0_i32_0 = arith.constant 0 : i32
    return %arg0, %c0_i32 : i32, i32
  }
  func.func @transform_1(%arg0: i32, %arg1: memref<1xi32, #tpu.memory_space<smem>>) -> (i32, i32) {
    %c0_i32 = arith.constant 0 : i32
    %c0_i32_0 = arith.constant 0 : i32
    return %arg0, %c0_i32 : i32, i32
  }
}

</mosaic_0001>

<llo_original>
// kernel: _dropout_dpp_eval.1
$region0: #{_dropout_dpp_eval.1}
  #allocation0 [shape = 'u32[]', space=smem, size = 0x4, offset = 0x4, fixed_abs, tag = 'smem constant byte address 0x4 - core index']
  #allocation1 [shape = 'u32[72,128]{1,0:T(1,128)}', space=vmem, size = 0x9000, scoped, tag = 'internal scratch']
  #allocation2 [shape = 's32[2,1024]{1,0:T(2,128)}', space=vmem, size = 0x2000, scoped, tag = 'scratch operand']
  #allocation3 [shape = 'f32[2,1024]{1,0:T(2,128)}', space=vmem, size = 0x2000, scoped, tag = 'scratch operand']
  #allocation4 [shape = 'f32[2,1024]{1,0:T(2,128)}', space=vmem, size = 0x2000, scoped, tag = 'scratch operand']
  #allocation5 [shape = 's32[1]{0}', space=sflag, size = 0x4, scoped, tag = 'scoped memory for _dropout_dpp_eval.1']
  #allocation6 [shape = 's32[1]{0:T(128)S(6)}', space=smem, size = 0x200, scoped, tag = 'prefetched SMEM operand 0']
  %s0 = inlined_call_operand.<no memory space> [shape: s32[1], index: 0, kind: input, shape index: {}]
  %s1 = inlined_call_operand.vmem [shape: f32[2,1024], index: 1, kind: input, shape index: {}]
  %s2 = inlined_call_operand.vmem [shape: f32[2,1024], index: 2, kind: output, shape index: {}]
  %s3 = sld [smem:[#allocation0]]
  $region21: #{_dropout_dpp_eval.1} parent=0
    _
  %s5 = ssub.s32 1, %s3
  %s6 = scalar_select 0, %s5, %s3
  %7 = sst [smem:[#allocation6]] %s0
  // Predicated region
  $region2: #{_dropout_dpp_eval.1} parent=0 // pred_check
    _
  $region3: #{_dropout_dpp_eval.1} parent=0 // pred_check_branch
    %9 = sbr.rel (0) target = $region5
  $region4: #{_dropout_dpp_eval.1} parent=0 // pred_region
    _
  $region5: #{_dropout_dpp_eval.1} parent=0 // pred_fallthru
    _
  %v10 = vlaneseq
  %v11 = vshrl.u32 %v10, 7
  %v12 = vlaneseq
  %v13 = vand.u32 %v12, 127
  %v14 = vadd.s32 %v13, 128
  %v15 = vadd.s32 %v13, 256
  %v16 = vadd.s32 %v13, 384
  %v17 = vadd.s32 %v13, 512
  %v18 = vadd.s32 %v13, 640
  %v19 = vadd.s32 %v13, 768
  %v20 = vadd.s32 %v13, 896
  %s21 = smul.u32 0, 2048
  %v22 = vshll.u32 %v11, 10
  %v23 = vstv %s21
  %v24 = vadd.s32 %v23, %v22
  %v25 = vadd.s32 %v24, %v13
  %v26 = vadd.s32 %v24, %v14
  %v27 = vadd.s32 %v24, %v15
  %v28 = vadd.s32 %v24, %v16
  %v29 = vadd.s32 %v24, %v17
  %v30 = vadd.s32 %v24, %v18
  %v31 = vadd.s32 %v24, %v19
  %v32 = vadd.s32 %v24, %v20
  %s33 = sld [smem:[#allocation6]]
  %s34 = smul.u32 %s33, 2654435769
  %v35 = vstv %s34
  %v36 = vadd.s32 %v25, %v35
  %v37 = vadd.s32 %v26, %v35
  %v38 = vadd.s32 %v27, %v35
  %v39 = vadd.s32 %v28, %v35
  %v40 = vadd.s32 %v29, %v35
  %v41 = vadd.s32 %v30, %v35
  %v42 = vadd.s32 %v31, %v35
  %v43 = vadd.s32 %v32, %v35
  %v44 = vshrl.u32 %v36, 16
  %v45 = vshrl.u32 %v37, 16
  %v46 = vshrl.u32 %v38, 16
  %v47 = vshrl.u32 %v39, 16
  %v48 = vshrl.u32 %v40, 16
  %v49 = vshrl.u32 %v41, 16
  %v50 = vshrl.u32 %v42, 16
  %v51 = vshrl.u32 %v43, 16
  %v52 = vxor.u32 %v36, %v44
  %v53 = vxor.u32 %v37, %v45
  %v54 = vxor.u32 %v38, %v46
  %v55 = vxor.u32 %v39, %v47
  %v56 = vxor.u32 %v40, %v48
  %v57 = vxor.u32 %v41, %v49
  %v58 = vxor.u32 %v42, %v50
  %v59 = vxor.u32 %v43, %v51
  %v60 = vmul.u32 %v52, 2146121005
  %v61 = vmul.u32 %v53, 2146121005
  %v62 = vmul.u32 %v54, 2146121005
  %v63 = vmul.u32 %v55, 2146121005
  %v64 = vmul.u32 %v56, 2146121005
  %v65 = vmul.u32 %v57, 2146121005
  %v66 = vmul.u32 %v58, 2146121005
  %v67 = vmul.u32 %v59, 2146121005
  %v68 = vshrl.u32 %v60, 15
  %v69 = vshrl.u32 %v61, 15
  %v70 = vshrl.u32 %v62, 15
  %v71 = vshrl.u32 %v63, 15
  %v72 = vshrl.u32 %v64, 15
  %v73 = vshrl.u32 %v65, 15
  %v74 = vshrl.u32 %v66, 15
  %v75 = vshrl.u32 %v67, 15
  %v76 = vxor.u32 %v60, %v68
  %v77 = vxor.u32 %v61, %v69
  %v78 = vxor.u32 %v62, %v70
  %v79 = vxor.u32 %v63, %v71
  %v80 = vxor.u32 %v64, %v72
  %v81 = vxor.u32 %v65, %v73
  %v82 = vxor.u32 %v66, %v74
  %v83 = vxor.u32 %v67, %v75
  %v84 = vmul.u32 %v76, 2221713035
  %v85 = vmul.u32 %v77, 2221713035
  %v86 = vmul.u32 %v78, 2221713035
  %v87 = vmul.u32 %v79, 2221713035
  %v88 = vmul.u32 %v80, 2221713035
  %v89 = vmul.u32 %v81, 2221713035
  %v90 = vmul.u32 %v82, 2221713035
  %v91 = vmul.u32 %v83, 2221713035
  %v92 = vshrl.u32 %v84, 16
  %v93 = vshrl.u32 %v85, 16
  %v94 = vshrl.u32 %v86, 16
  %v95 = vshrl.u32 %v87, 16
  %v96 = vshrl.u32 %v88, 16
  %v97 = vshrl.u32 %v89, 16
  %v98 = vshrl.u32 %v90, 16
  %v99 = vshrl.u32 %v91, 16
  %v100 = vxor.u32 %v84, %v92
  %v101 = vxor.u32 %v85, %v93
  %v102 = vxor.u32 %v86, %v94
  %v103 = vxor.u32 %v87, %v95
  %v104 = vxor.u32 %v88, %v96
  %v105 = vxor.u32 %v89, %v97
  %v106 = vxor.u32 %v90, %v98
  %v107 = vxor.u32 %v91, %v99
  %v108 = vor.u32 %v100, 1
  %v109 = vor.u32 %v101, 1
  %v110 = vor.u32 %v102, 1
  %v111 = vor.u32 %v103, 1
  %v112 = vor.u32 %v104, 1
  %v113 = vor.u32 %v105, 1
  %v114 = vor.u32 %v106, 1
  %v115 = vor.u32 %v107, 1
  %v116 = vrot.slane %v109, 6
  %v117 = vrot.slane %v110, 4
  %v118 = vrot.slane %v111, 2
  %v119 = vrot.slane %v113, 6
  %v120 = vrot.slane %v114, 4
  %v121 = vrot.slane %v115, 2
  %vm122 = vcmask 1041408
  %v123 = vsel %vm122, %v108, %v116
  %vm124 = vcmask 1045508
  %v125 = vsel %vm124, %v117, %v118
  %vm126 = vcmask 1043456
  %v127 = vsel %vm126, %v123, %v125
  %v128 = vsel %vm122, %v112, %v119
  %v129 = vsel %vm124, %v120, %v121
  %v130 = vsel %vm126, %v128, %v129
  %131 = vst [vmem:[#allocation2] sm:$0xff] %v127
  %132 = vst [vmem:[#allocation2 + $0x8] sm:$0xff] %v130
  %v133 = vld [vmem:[#allocation2] sm:$0xff]
  %v134 = vld [vmem:[#allocation2 + $0x8] sm:$0xff]
  %v135 = vshll.u32 %v133, 13
  %v136 = vshll.u32 %v134, 13
  %v137 = vxor.u32 %v133, %v135
  %v138 = vxor.u32 %v134, %v136
  %v139 = vshrl.u32 %v137, 17
  %v140 = vshrl.u32 %v138, 17
  %v141 = vxor.u32 %v137, %v139
  %v142 = vxor.u32 %v138, %v140
  %v143 = vshll.u32 %v141, 5
  %v144 = vshll.u32 %v142, 5
  %v145 = vxor.u32 %v141, %v143
  %v146 = vxor.u32 %v142, %v144
  %147 = vst [vmem:[#allocation2] sm:$0xff] %v145
  %148 = vst [vmem:[#allocation2 + $0x8] sm:$0xff] %v146
  %v149 = vadd.s32 %v145, 2147483648
  %vm151 = vcmp.ge.s32.totalorder %v149, 1717986918
  %v152 = vadd.s32 %v146, 2147483648
  %vm154 = vcmp.ge.s32.totalorder %v152, 1717986918
  %v155 = vsel %vm151, 1, 0
  %v156 = vsel %vm154, 1, 0
  %v157 = vcvt.s32.f32 %v155
  %v158 = vcvt.s32.f32 %v156
  %159 = vst [vmem:[#allocation3] sm:$0xff] %v157
  %160 = vst [vmem:[#allocation3 + $0x8] sm:$0xff] %v158
  %161 = vst [vmem:[#allocation4] sm:$0xff] %v157
  %162 = vst [vmem:[#allocation4 + $0x8] sm:$0xff] %v158
  %v163 = vld [vmem:[#allocation4] sm:$0xff]
  %v164 = vld [vmem:[#allocation4 + $0x8] sm:$0xff]
  %167 = vst [vmem:[#allocation1] ss:$4 sm:$0xff] %v163
  %s168 = scalar_lea.vmem [#allocation1], 32
  %169 = vst [vmem:[%s168] ss:$4 sm:$0xff] %v164
  %v170 = vld.sshfl [vmem:[#allocation1] sm:$0xff pattern:$0x73625140]
  %v171 = vld.sshfl [vmem:[#allocation1 + $0x8] sm:$0xff pattern:$0x73625140]
  %v172 = vld.sshfl [vmem:[#allocation1 + $0x10] sm:$0xff pattern:$0x73625140]
  %v173 = vld.sshfl [vmem:[#allocation1 + $0x18] sm:$0xff pattern:$0x73625140]
  %v174 = vld.sshfl [vmem:[#allocation1 + $0x20] sm:$0xff pattern:$0x73625140]
  %v175 = vld.sshfl [vmem:[#allocation1 + $0x28] sm:$0xff pattern:$0x73625140]
  %v176 = vld.sshfl [vmem:[#allocation1 + $0x30] sm:$0xff pattern:$0x73625140]
  %v177 = vld.sshfl [vmem:[#allocation1 + $0x38] sm:$0xff pattern:$0x73625140]
  %v186 = vsel %vm122, %v170, 0.0
  %v187 = vsel %vm122, %v171, 0.0
  %v188 = vadd.f32 %v186, %v187
  %v189 = vsel %vm122, %v172, 0.0
  %v190 = vadd.f32 %v188, %v189
  %v191 = vsel %vm122, %v173, 0.0
  %v192 = vadd.f32 %v190, %v191
  %v193 = vsel %vm122, %v174, 0.0
  %v194 = vadd.f32 %v192, %v193
  %v195 = vsel %vm122, %v175, 0.0
  %v196 = vadd.f32 %v194, %v195
  %v197 = vsel %vm122, %v176, 0.0
  %v198 = vadd.f32 %v196, %v197
  %v199 = vsel %vm122, %v177, 0.0
  %v200 = vadd.f32 %v198, %v199
  %201 = vadd.xlane.f32.xlu0 %v200
  %v202 = vpop.xlane.xlu0 %201
  %v203 = vrot.slane %v202, 4
  %v204 = vadd.f32 %v202, %v203
  %v205 = vrot.slane %v204, 2
  %v206 = vadd.f32 %v204, %v205
  %v207 = vrot.slane %v206, 1
  %v208 = vadd.f32 %v206, %v207
  %s209 = vtos %v208
  // While loop
  $region6: #{_dropout_dpp_eval.1} parent=0 // loop_pre_header
    _
  $region7: #{_dropout_dpp_eval.1} parent=0 // loop_header
    %s211 = sphi 1, %s257
    %s212 = sphi %s209, %s304
    %p213 = scmp.lt.s32.totalorder %s211, 100
    %p214 = scmp.lt.f32.partialorder %s212, 819.2
    %p215 = pnand %p213, %p214
    %p216 = pneg %p215
  $region8: #{_dropout_dpp_eval.1} parent=0 // loop_header_branch
    %218 = sbr.rel (%p215) target = $region12
  $region9: #{_dropout_dpp_eval.1} parent=0 // loop_body
    %v219 = vld [vmem:[#allocation2] sm:$0xff]
    %v220 = vld [vmem:[#allocation2 + $0x8] sm:$0xff]
    %v221 = vshll.u32 %v219, 13
    %v222 = vshll.u32 %v220, 13
    %v223 = vxor.u32 %v219, %v221
    %v224 = vxor.u32 %v220, %v222
    %v225 = vshrl.u32 %v223, 17
    %v226 = vshrl.u32 %v224, 17
    %v227 = vxor.u32 %v223, %v225
    %v228 = vxor.u32 %v224, %v226
    %v229 = vshll.u32 %v227, 5
    %v230 = vshll.u32 %v228, 5
    %v231 = vxor.u32 %v227, %v229
    %v232 = vxor.u32 %v228, %v230
    %233 = vst [vmem:[#allocation2] sm:$0xff] %v231
    %234 = vst [vmem:[#allocation2 + $0x8] sm:$0xff] %v232
    %v235 = vadd.s32 %v231, 2147483648
    %vm237 = vcmp.ge.s32.totalorder %v235, 1717986918
    %v238 = vadd.s32 %v232, 2147483648
    %vm240 = vcmp.ge.s32.totalorder %v238, 1717986918
    %v241 = vsel %vm237, 1, 0
    %v242 = vsel %vm240, 1, 0
    %v243 = vcvt.s32.f32 %v241
    %v244 = vcvt.s32.f32 %v242
    %v245 = vld [vmem:[#allocation3] sm:$0xff]
    %v246 = vld [vmem:[#allocation3 + $0x8] sm:$0xff]
    %v247 = vadd.f32 %v245, %v243
    %v248 = vadd.f32 %v246, %v244
    %249 = vst [vmem:[#allocation3] sm:$0xff] %v247
    %250 = vst [vmem:[#allocation3 + $0x8] sm:$0xff] %v248
    %v251 = vld [vmem:[#allocation4] sm:$0xff]
    %v252 = vld [vmem:[#allocation4 + $0x8] sm:$0xff]
    %v253 = vmax.f32 %v251, %v243
    %v254 = vmax.f32 %v252, %v244
    %255 = vst [vmem:[#allocation4] sm:$0xff] %v253
    %256 = vst [vmem:[#allocation4 + $0x8] sm:$0xff] %v254
    %s257 = sadd.s32 %s211, 1
    %v258 = vld [vmem:[#allocation4] sm:$0xff]
    %v259 = vld [vmem:[#allocation4 + $0x8] sm:$0xff]
    %262 = vst [vmem:[#allocation1] ss:$4 sm:$0xff] %v258
    %s263 = scalar_lea.vmem [#allocation1], 32
    %264 = vst [vmem:[%s263] ss:$4 sm:$0xff] %v259
    %v265 = vld.sshfl [vmem:[#allocation1] sm:$0xff pattern:$0x73625140]
    %v266 = vld.sshfl [vmem:[#allocation1 + $0x8] sm:$0xff pattern:$0x73625140]
    %v267 = vld.sshfl [vmem:[#allocation1 + $0x10] sm:$0xff pattern:$0x73625140]
    %v268 = vld.sshfl [vmem:[#allocation1 + $0x18] sm:$0xff pattern:$0x73625140]
    %v269 = vld.sshfl [vmem:[#allocation1 + $0x20] sm:$0xff pattern:$0x73625140]
    %v270 = vld.sshfl [vmem:[#allocation1 + $0x28] sm:$0xff pattern:$0x73625140]
    %v271 = vld.sshfl [vmem:[#allocation1 + $0x30] sm:$0xff pattern:$0x73625140]
    %v272 = vld.sshfl [vmem:[#allocation1 + $0x38] sm:$0xff pattern:$0x73625140]
    %v281 = vsel %vm122, %v265, 0.0
    %v282 = vsel %vm122, %v266, 0.0
    %v283 = vadd.f32 %v281, %v282
    %v284 = vsel %vm122, %v267, 0.0
    %v285 = vadd.f32 %v283, %v284
    %v286 = vsel %vm122, %v268, 0.0
    %v287 = vadd.f32 %v285, %v286
    %v288 = vsel %vm122, %v269, 0.0
    %v289 = vadd.f32 %v287, %v288
    %v290 = vsel %vm122, %v270, 0.0
    %v291 = vadd.f32 %v289, %v290
    %v292 = vsel %vm122, %v271, 0.0
    %v293 = vadd.f32 %v291, %v292
    %v294 = vsel %vm122, %v272, 0.0
    %v295 = vadd.f32 %v293, %v294
    %296 = vadd.xlane.f32.xlu0 %v295
    %v297 = vpop.xlane.xlu0 %296
    %v298 = vrot.slane %v297, 4
    %v299 = vadd.f32 %v297, %v298
    %v300 = vrot.slane %v299, 2
    %v301 = vadd.f32 %v299, %v300
    %v302 = vrot.slane %v301, 1
    %v303 = vadd.f32 %v301, %v302
    %s304 = vtos %v303
  $region10: #{_dropout_dpp_eval.1} parent=0 // loop_footer
    _
  $region11: #{_dropout_dpp_eval.1} parent=0 // loop_footer_branch
    %210 = sbr.rel target = $region7
  $region12: #{_dropout_dpp_eval.1} parent=0 // loop_exit
    _
  %s305 = scvt.s32.f32 %s211
  %v306 = vstv %s305
  %v307 = vrcp.pop %v306
  %v308 = vmul.f32 %v306, %v307
  %v309 = vsub.f32 1.0, %v308
  %v310 = vmul.f32 %v307, %v309
  %v311 = vadd.f32 %v307, %v310
  %vm312 = vweird.f32 %v306
  %vm313 = vweird.f32 %v307
  %vm314 = vmor %vm312, %vm313
  %v315 = vsel %vm314, %v307, %v311
  %v316 = vand.u32 2147483647, %v306
  %vm317 = vcmp.eq.f32.partialorder %v316, 8.507059e+37
  %v318 = vand.u32 %v306, 2147483648
  %v319 = vor.u32 1.1754944e-38, %v318
  %v320 = vsel %vm317, %v319, %v315
  %s321 = vtos %v320
  %v322 = vld [vmem:[%s1] sm:$0xff]
  %v323 = vld [vmem:[%s1 + $0x8] sm:$0xff]
  %v324 = vld [vmem:[#allocation3] sm:$0xff]
  %v325 = vld [vmem:[#allocation3 + $0x8] sm:$0xff]
  %v326 = vmul.f32 %v322, %v324
  %v327 = vmul.f32 %v323, %v325
  %v328 = vstv %s321
  %v329 = vmul.f32 %v326, %v328
  %v330 = vmul.f32 %v327, %v328
  %331 = vst [vmem:[%s2] sm:$0xff] %v329
  %332 = vst [vmem:[%s2 + $0x8] sm:$0xff] %v330
  // Predicated region
  $region13: #{_dropout_dpp_eval.1} parent=0 // pred_check
    _
  $region14: #{_dropout_dpp_eval.1} parent=0 // pred_check_branch
    %334 = sbr.rel (0) target = $region16
  $region15: #{_dropout_dpp_eval.1} parent=0 // pred_region
    _
  $region16: #{_dropout_dpp_eval.1} parent=0 // pred_fallthru
    _
  // Predicated region
  $region17: #{_dropout_dpp_eval.1} parent=0 // pred_check
    _
  $region18: #{_dropout_dpp_eval.1} parent=0 // pred_check_branch
    %336 = sbr.rel (0) target = $region20
  $region19: #{_dropout_dpp_eval.1} parent=0 // pred_region
    _
  $region20: #{_dropout_dpp_eval.1} parent=0 // pred_fallthru
    _

</llo_original>
